<compile_context>
chip_gen: v6e
topology: v6e:2x2x1
jax: 0.10.0
libtpu: 0.0.40
codegen_flags: <defaults>
</compile_context>

<pallas_src>
import functools

import jax
import jax.numpy as jnp
from jax.experimental import pallas as pl
from jax.experimental.pallas import tpu as pltpu


def _assigner_kernel(num_classes,
                     kp_ref, bw_ref, valid_ref, onehot_ref, neg_ref,
                     cls_ref, reg_ref):
    C = num_classes
    TN = kp_ref.shape[2]
    Mb_pad = valid_ref.shape[1]
    C7P = reg_ref.shape[1]                 # padded C*7
    CLSP = cls_ref.shape[1]                # padded C+2
    CLS_GRP = onehot_ref.shape[0] - C7P    # padded C+1 (one-hot + "any" rows)

    # ---- build augmented keypoint rows in-kernel: [x, y, z, 1, |p|^2, 0, 0, 0] ----
    kp3 = kp_ref[0]                                        # (3, TN)
    x = kp3[0:1, :]
    y = kp3[1:2, :]
    z = kp3[2:3, :]
    psq = x * x + y * y + z * z                            # (1, TN)
    kp_aug = jnp.concatenate(
        [kp3, jnp.ones((1, TN), jnp.float32), psq,
         jnp.zeros((3, TN), jnp.float32)], axis=0)         # (8, TN)

    # ---- single fused MXU matmul: radius scores + per-class regression rows ----
    fused = jnp.dot(bw_ref[...], kp_aug,
                    preferred_element_type=jnp.float32)    # (Mb_pad + C7P, TN)
    score = fused[0:Mb_pad, :]                             # dist^2 - r^2 per box
    raw_reg = fused[Mb_pad:Mb_pad + C7P, :]                # ctr - xyz / rel / ang rows

    # ---- match_keypoints: strict dist < r, gated to the correct batch ----
    valid = valid_ref[0]                                   # (Mb_pad, 1) 1.0 / 0.0
    match_bf = jnp.where(jnp.logical_and(score < 0.0, valid > 0.0),
                         1.0, 0.0).astype(jnp.bfloat16)    # (Mb_pad, TN) exact 0/1

    # ---- per-class / any-box / 7x-replicated positives: one bf16 matmul ----
    counts = jnp.dot(onehot_ref[...], match_bf,
                     preferred_element_type=jnp.float32)   # (CLS_GRP + C7P, TN)
    matched = counts > 0.5
    pos = matched[0:C, :]                                  # (C, TN)
    any_pos = matched[C:C + 1, :]                          # (1, TN)
    pos_exp = matched[CLS_GRP:CLS_GRP + C7P, :].astype(jnp.float32)  # (C7P, TN)

    # ---- make_cls_targets: negatives first, positives overwrite; single store ----
    neg = neg_ref[...] != 0                                # (1, TN)
    background = jnp.logical_and(neg, jnp.logical_not(any_pos))
    ignore = jnp.logical_not(jnp.logical_or(neg, any_pos))
    pieces = [pos.astype(jnp.int32),
              background.astype(jnp.int32),
              ignore.astype(jnp.int32)]
    if CLSP > C + 2:
        pieces.append(jnp.zeros((CLSP - (C + 2), TN), jnp.int32))
    cls_ref[0] = jnp.concatenate(pieces, axis=0)           # one (CLSP, TN) store
    # fill_ambiguous: no-op in the reference -> no-op here.

    # ---- make_reg_targets: mask the pre-expanded rows; single store ----
    reg_ref[0] = pos_exp * raw_reg                         # one (C7P, TN) store


def refinement_targets(keypoints, boxes_list, class_ids_list,
                       anchor_sizes, anchor_radii, num_classes,
                       num_negatives, rng_key):
    B, N, _ = keypoints.shape
    C = num_classes
    box_counts = [int(bx.shape[0]) for bx in boxes_list]
    boxes = jnp.concatenate(boxes_list, axis=0).astype(jnp.float32)        # (Mb, 7)
    class_ids = jnp.concatenate(class_ids_list, axis=0).astype(jnp.int32)  # (Mb,)
    Mb = int(boxes.shape[0])
    assert Mb >= C, "reference indexes box arrays by class id (requires Mb >= C)"

    LANE = 128
    N_pad = -(-N // LANE) * LANE
    TILE_N = next(t for t in (2048, 1024, 512, 256, 128) if N_pad % t == 0)
    # keep >= 2 total grid steps so both v7x TensorCores get work
    if B == 1 and N_pad // TILE_N < 2 and TILE_N > LANE:
        TILE_N //= 2
    Mb_pad = -(-Mb // 8) * 8
    C7 = C * 7
    C7P = -(-C7 // 8) * 8                  # reg channels padded to sublane multiple
    CLSP = -(-(C + 2) // 8) * 8            # cls channels padded to sublane multiple
    CLS_GRP = -(-(C + 1) // 8) * 8         # one-hot + "any" rows, padded

    centers = boxes[:, 0:3]
    sizes = boxes[:, 3:6]
    angles = boxes[:, 6:7]

    # ---- keypoints: just xyz rows, N on the lane axis (augmentation is in-kernel) ----
    kp3 = jnp.zeros((B, 3, N_pad), jnp.float32).at[:, :, :N].set(
        jnp.swapaxes(keypoints.astype(jnp.float32), 1, 2))

    # ---- shared box rows: [-2c, |c|^2 - r^2, 1, 0, 0, 0, 0, 0] (radius test) ----
    radii2 = anchor_radii.astype(jnp.float32)[class_ids] ** 2             # (Mb,)
    c2 = jnp.sum(centers * centers, axis=1)                               # (Mb,)
    box_rows = jnp.concatenate(
        [-2.0 * centers, (c2 - radii2)[:, None],
         jnp.ones((Mb, 1), jnp.float32), jnp.zeros((Mb, 3), jnp.float32)], axis=1)
    box_rows = jnp.zeros((Mb_pad, 8), jnp.float32).at[:Mb].set(box_rows)

    # ---- W: per-class regression row expansion (reference bug: box idx == class id) ----
    anchor_sizes = anchor_sizes.astype(jnp.float32)
    rel = (sizes[:C] - anchor_sizes) / anchor_sizes                       # (C, 3)
    eye3 = jnp.eye(3, dtype=jnp.float32)
    zeros34 = jnp.zeros((3, 4), jnp.float32)
    blocks = []
    for c in range(C):
        blocks.append(jnp.concatenate(
            [-eye3, centers[c][:, None], zeros34], axis=1))               # ctr - xyz
        blocks.append(jnp.concatenate(
            [jnp.zeros((3, 3), jnp.float32), rel[c][:, None], zeros34], axis=1))
        blocks.append(jnp.concatenate(
            [jnp.zeros((1, 3), jnp.float32), angles[c][:, None],
             jnp.zeros((1, 4), jnp.float32)], axis=1))                    # angle
    W = jnp.concatenate(blocks, axis=0)                                   # (C*7, 8)
    W = jnp.zeros((C7P, 8), jnp.float32).at[:C7].set(W)
    bw = jnp.concatenate([box_rows, W], axis=0)                           # (Mb_pad+C7P, 8)

    # ---- per-batch box validity column (batch_correspondence_mask) ----
    box_batch = jnp.concatenate(
        [jnp.full((cnt,), i, jnp.int32) for i, cnt in enumerate(box_counts)])
    valid = (box_batch[None, :] ==
             jnp.arange(B, dtype=jnp.int32)[:, None]).astype(jnp.float32)  # (B, Mb)
    valid = jnp.zeros((B, Mb_pad), jnp.float32).at[:, :Mb].set(valid)[:, :, None]

    # ---- one-hot reduction matrix: [per-class | any-box | 7x-replicated] (bf16 exact) ----
    oh = (class_ids[None, :] ==
          jnp.arange(C, dtype=jnp.int32)[:, None]).astype(jnp.float32)    # (C, Mb)
    cls_grp = jnp.zeros((CLS_GRP, Mb_pad), jnp.float32)
    cls_grp = cls_grp.at[:C, :Mb].set(oh).at[C, :Mb].set(1.0)
    rep_grp = jnp.zeros((C7P, Mb_pad), jnp.float32)
    rep_grp = rep_grp.at[:C7, :Mb].set(jnp.repeat(oh, 7, axis=0))
    onehot = jnp.concatenate([cls_grp, rep_grp], axis=0).astype(jnp.bfloat16)

    # ---- fill_negatives (reference broadcast bug: union over all batches) ----
    neg_inds = jax.random.randint(rng_key, (B, num_negatives), 0, N)
    neg_row = jnp.zeros((N_pad,), jnp.int32).at[neg_inds.reshape(-1)].set(1)[None, :]

    kernel = functools.partial(_assigner_kernel, C)
    cls_t, reg_t = pl.pallas_call(
        kernel,
        out_shape=(jax.ShapeDtypeStruct((B, CLSP, N_pad), jnp.int32),
                   jax.ShapeDtypeStruct((B, C7P, N_pad), jnp.float32)),
        grid=(B, N_pad // TILE_N),
        in_specs=[
            pl.BlockSpec((1, 3, TILE_N), lambda b, t: (b, 0, t)),          # xyz rows
            pl.BlockSpec((Mb_pad + C7P, 8), lambda b, t: (0, 0)),          # box rows + W
            pl.BlockSpec((1, Mb_pad, 1), lambda b, t: (b, 0, 0)),          # batch validity
            pl.BlockSpec((CLS_GRP + C7P, Mb_pad), lambda b, t: (0, 0)),    # one-hot matrix
            pl.BlockSpec((1, TILE_N), lambda b, t: (0, t)),                # negative mask
        ],
        out_specs=(pl.BlockSpec((1, CLSP, TILE_N), lambda b, t: (b, 0, t)),
                   pl.BlockSpec((1, C7P, TILE_N), lambda b, t: (b, 0, t))),
        compiler_params=pltpu.CompilerParams(
            dimension_semantics=("parallel", "parallel")),
    )(kp3, bw, valid, onehot, neg_row)

    targets_cls = jnp.transpose(cls_t, (0, 2, 1))[:, :N, :C + 2]          # (B, N, C+2)
    targets_reg = jnp.transpose(reg_t, (0, 2, 1))[:, :N, :C7].reshape(B, N, C, 7)
    return targets_cls, targets_reg


if __name__ == "__main__":
    key = jax.random.PRNGKey(0)
    B, N = 2, 128
    num_classes = 3
    num_negatives = 16
    box_counts = [5, 3]

    # Deterministic "cfg" parameters (anchor wlh / radius per class).
    anchor_sizes = jnp.array([[1.6, 3.9, 1.56],
                              [0.6, 0.8, 1.73],
                              [0.6, 1.76, 1.73]], jnp.float32)
    anchor_radii = jnp.array([2.5, 1.5, 2.0], jnp.float32)

    k_kp, k_box, k_cid, k_neg = jax.random.split(key, 4)
    keypoints = jax.random.uniform(k_kp, (B, N, 3), jnp.float32, 0.0, 10.0)

    boxes_list, class_ids_list = [], []
    k_box_per = jax.random.split(k_box, len(box_counts))
    k_cid_per = jax.random.split(k_cid, len(box_counts))
    for bi, cnt in enumerate(box_counts):
        kc1, kc2, kc3 = jax.random.split(k_box_per[bi], 3)
        ctr = jax.random.uniform(kc1, (cnt, 3), jnp.float32, 0.0, 10.0)
        sz = jax.random.uniform(kc2, (cnt, 3), jnp.float32, 0.5, 4.0)
        ang = jax.random.uniform(kc3, (cnt, 1), jnp.float32, -3.14, 3.14)
        boxes_list.append(jnp.concatenate([ctr, sz, ang], axis=1))
        class_ids_list.append(
            jax.random.randint(k_cid_per[bi], (cnt,), 0, num_classes).astype(jnp.int32))

    targets_cls, targets_reg = refinement_targets(
        keypoints, boxes_list, class_ids_list, anchor_sizes, anchor_radii,
        num_classes, num_negatives, k_neg)
    jax.block_until_ready((targets_cls, targets_reg))

    assert targets_cls.shape == (B, N, num_classes + 2)
    assert targets_cls.dtype == jnp.int32
    assert targets_reg.shape == (B, N, num_classes, 7)
    assert targets_reg.dtype == jnp.float32
    print("KERNEL_OK")
</pallas_src>

<mosaic_0001>
module attributes {stable_mosaic.version = 11 : i64} {
  func.func @_assigner_kernel(%arg0: i32, %arg1: i32, %arg2: memref<1x3x128xf32, #tpu.memory_space<vmem>>, %arg3: memref<32x8xf32, #tpu.memory_space<vmem>>, %arg4: memref<1x8x1xf32, #tpu.memory_space<vmem>>, %arg5: memref<32x8xbf16, #tpu.memory_space<vmem>>, %arg6: memref<1x128xi32, #tpu.memory_space<vmem>>, %arg7: memref<1x8x128xi32, #tpu.memory_space<vmem>>, %arg8: memref<1x24x128xf32, #tpu.memory_space<vmem>>) attributes {dimension_semantics = [#tpu.dimension_semantics<parallel>, #tpu.dimension_semantics<parallel>], iteration_bounds = array<i64: 2, 1>, scalar_prefetch = 0 : i64, scratch_operands = 0 : i64, tpu.core_type = #tpu.core_type<tc>, window_params = [{transform_indices = @transform_0, window_bounds = array<i64: 1, 3, 128>}, {pipeline_mode = #tpu.pipeline_mode<synchronous>, transform_indices = @transform_1, window_bounds = array<i64: 32, 8>}, {transform_indices = @transform_2, window_bounds = array<i64: 1, 8, 1>}, {pipeline_mode = #tpu.pipeline_mode<synchronous>, transform_indices = @transform_3, window_bounds = array<i64: 32, 8>}, {transform_indices = @transform_4, window_bounds = array<i64: 1, 128>}, {transform_indices = @transform_5, window_bounds = array<i64: 1, 8, 128>}, {transform_indices = @transform_6, window_bounds = array<i64: 1, 24, 128>}]} {
    %c0 = arith.constant 0 : index
    %c0_0 = arith.constant 0 : index
    %c0_1 = arith.constant 0 : index
    %0 = vector.load %arg2[%c0, %c0_0, %c0_1] : memref<1x3x128xf32, #tpu.memory_space<vmem>>, vector<1x3x128xf32>
    %1 = vector.shape_cast %0 : vector<1x3x128xf32> to vector<3x128xf32>
    %2 = vector.extract_strided_slice %1 {offsets = [0, 0], sizes = [1, 128], strides = [1, 1]} : vector<3x128xf32> to vector<1x128xf32>
    %3 = vector.extract_strided_slice %1 {offsets = [1, 0], sizes = [1, 128], strides = [1, 1]} : vector<3x128xf32> to vector<1x128xf32>
    %4 = vector.extract_strided_slice %1 {offsets = [2, 0], sizes = [1, 128], strides = [1, 1]} : vector<3x128xf32> to vector<1x128xf32>
    %5 = arith.mulf %2, %2 : vector<1x128xf32>
    %6 = arith.mulf %3, %3 : vector<1x128xf32>
    %7 = arith.addf %5, %6 : vector<1x128xf32>
    %8 = arith.mulf %4, %4 : vector<1x128xf32>
    %9 = arith.addf %7, %8 : vector<1x128xf32>
    %cst = arith.constant 1.000000e+00 : f32
    %10 = vector.broadcast %cst : f32 to vector<1x128xf32>
    %cst_2 = arith.constant 0.000000e+00 : f32
    %11 = vector.broadcast %cst_2 : f32 to vector<3x128xf32>
    %12 = tpu.concatenate %1, %10, %9, %11 in 0 : vector<3x128xf32>, vector<1x128xf32>, vector<1x128xf32>, vector<3x128xf32> -> vector<8x128xf32>
    %c0_3 = arith.constant 0 : index
    %c0_4 = arith.constant 0 : index
    %13 = vector.load %arg3[%c0_3, %c0_4] : memref<32x8xf32, #tpu.memory_space<vmem>>, vector<32x8xf32>
    %cst_5 = arith.constant dense<0.000000e+00> : vector<32x128xf32>
    %14 = tpu.matmul %13, %12, %cst_5 {dimension_numbers = #tpu.dot_dimension_numbers<[1], [0], [0], [1], [0, 0, 1, 1], [], []>} : vector<32x8xf32>, vector<8x128xf32>, vector<32x128xf32> -> vector<32x128xf32>
    %15 = vector.extract_strided_slice %14 {offsets = [0, 0], sizes = [8, 128], strides = [1, 1]} : vector<32x128xf32> to vector<8x128xf32>
    %16 = vector.extract_strided_slice %14 {offsets = [8, 0], sizes = [24, 128], strides = [1, 1]} : vector<32x128xf32> to vector<24x128xf32>
    %c0_6 = arith.constant 0 : index
    %c0_7 = arith.constant 0 : index
    %c0_8 = arith.constant 0 : index
    %17 = vector.load %arg4[%c0_6, %c0_7, %c0_8] : memref<1x8x1xf32, #tpu.memory_space<vmem>>, vector<1x8x1xf32>
    %18 = vector.shape_cast %17 : vector<1x8x1xf32> to vector<8x1xf32>
    %cst_9 = arith.constant 0.000000e+00 : f32
    %19 = vector.broadcast %cst_9 : f32 to vector<8x128xf32>
    %20 = arith.cmpf olt, %15, %19 : vector<8x128xf32>
    %cst_10 = arith.constant 0.000000e+00 : f32
    %21 = vector.broadcast %cst_10 : f32 to vector<8x1xf32>
    %22 = arith.cmpf ogt, %18, %21 : vector<8x1xf32>
    %23 = vector.broadcast %22 : vector<8x1xi1> to vector<8x128xi1>
    %24 = arith.andi %20, %23 : vector<8x128xi1>
    %cst_11 = arith.constant 1.000000e+00 : f32
    %cst_12 = arith.constant 0.000000e+00 : f32
    %25 = vector.broadcast %cst_11 : f32 to vector<8x128xf32>
    %26 = vector.broadcast %cst_12 : f32 to vector<8x128xf32>
    %27 = arith.select %24, %25, %26 : vector<8x128xi1>, vector<8x128xf32>
    %28 = arith.truncf %27 : vector<8x128xf32> to vector<8x128xbf16>
    %c0_13 = arith.constant 0 : index
    %c0_14 = arith.constant 0 : index
    %29 = vector.load %arg5[%c0_13, %c0_14] : memref<32x8xbf16, #tpu.memory_space<vmem>>, vector<32x8xbf16>
    %cst_15 = arith.constant dense<0.000000e+00> : vector<32x128xf32>
    %30 = tpu.matmul %29, %28, %cst_15 {dimension_numbers = #tpu.dot_dimension_numbers<[1], [0], [0], [1], [0, 0, 1, 1], [], []>} : vector<32x8xbf16>, vector<8x128xbf16>, vector<32x128xf32> -> vector<32x128xf32>
    %cst_16 = arith.constant 5.000000e-01 : f32
    %31 = vector.broadcast %cst_16 : f32 to vector<32x128xf32>
    %32 = arith.cmpf ogt, %30, %31 : vector<32x128xf32>
    %33 = vector.extract_strided_slice %32 {offsets = [0, 0], sizes = [3, 128], strides = [1, 1]} : vector<32x128xi1> to vector<3x128xi1>
    %34 = vector.extract_strided_slice %32 {offsets = [3, 0], sizes = [1, 128], strides = [1, 1]} : vector<32x128xi1> to vector<1x128xi1>
    %35 = vector.extract_strided_slice %32 {offsets = [8, 0], sizes = [24, 128], strides = [1, 1]} : vector<32x128xi1> to vector<24x128xi1>
    %36 = arith.extui %35 : vector<24x128xi1> to vector<24x128xi32>
    %37 = arith.sitofp %36 : vector<24x128xi32> to vector<24x128xf32>
    %c0_17 = arith.constant 0 : index
    %c0_18 = arith.constant 0 : index
    %38 = vector.load %arg6[%c0_17, %c0_18] : memref<1x128xi32, #tpu.memory_space<vmem>>, vector<1x128xi32>
    %c0_i32 = arith.constant 0 : i32
    %39 = vector.broadcast %c0_i32 : i32 to vector<1x128xi32>
    %40 = arith.cmpi ne, %38, %39 : vector<1x128xi32>
    %cst_19 = arith.constant dense<true> : vector<1x128xi1>
    %41 = arith.xori %34, %cst_19 : vector<1x128xi1>
    %42 = arith.andi %40, %41 : vector<1x128xi1>
    %43 = arith.ori %40, %34 : vector<1x128xi1>
    %cst_20 = arith.constant dense<true> : vector<1x128xi1>
    %44 = arith.xori %43, %cst_20 : vector<1x128xi1>
    %45 = arith.extui %33 : vector<3x128xi1> to vector<3x128xi32>
    %46 = arith.extui %42 : vector<1x128xi1> to vector<1x128xi32>
    %47 = arith.extui %44 : vector<1x128xi1> to vector<1x128xi32>
    %c0_i32_21 = arith.constant 0 : i32
    %48 = vector.broadcast %c0_i32_21 : i32 to vector<3x128xi32>
    %49 = tpu.concatenate %45, %46, %47, %48 in 0 : vector<3x128xi32>, vector<1x128xi32>, vector<1x128xi32>, vector<3x128xi32> -> vector<8x128xi32>
    %c0_22 = arith.constant 0 : index
    %c0_23 = arith.constant 0 : index
    %c0_24 = arith.constant 0 : index
    %50 = vector.load %arg7[%c0_22, %c0_23, %c0_24] : memref<1x8x128xi32, #tpu.memory_space<vmem>>, vector<1x8x128xi32>
    %51 = vector.shape_cast %50 : vector<1x8x128xi32> to vector<8x128xi32>
    %52 = vector.shape_cast %49 : vector<8x128xi32> to vector<1x8x128xi32>
    tpu.vector_store %arg7[%c0_22, %c0_23, %c0_24], %52 {strides = array<i32>} : memref<1x8x128xi32, #tpu.memory_space<vmem>>, vector<1x8x128xi32>,
    %53 = arith.mulf %37, %16 : vector<24x128xf32>
    %c0_25 = arith.constant 0 : index
    %c0_26 = arith.constant 0 : index
    %c0_27 = arith.constant 0 : index
    %54 = vector.load %arg8[%c0_25, %c0_26, %c0_27] : memref<1x24x128xf32, #tpu.memory_space<vmem>>, vector<1x24x128xf32>
    %55 = vector.shape_cast %54 : vector<1x24x128xf32> to vector<24x128xf32>
    %56 = vector.shape_cast %53 : vector<24x128xf32> to vector<1x24x128xf32>
    tpu.vector_store %arg8[%c0_25, %c0_26, %c0_27], %56 {strides = array<i32>} : memref<1x24x128xf32, #tpu.memory_space<vmem>>, vector<1x24x128xf32>,
    return
  }
  func.func @transform_0(%arg0: i32, %arg1: i32) -> (i32, i32, i32) {
    %c0_i32 = arith.constant 0 : i32
    %c0_i32_0 = arith.constant 0 : i32
    return %arg0, %c0_i32, %arg1 : i32, i32, i32
  }
  func.func @transform_1(%arg0: i32, %arg1: i32) -> (i32, i32) {
    %c0_i32 = arith.constant 0 : i32
    %c0_i32_0 = arith.constant 0 : i32
    %c0_i32_1 = arith.constant 0 : i32
    return %c0_i32, %c0_i32_0 : i32, i32
  }
  func.func @transform_2(%arg0: i32, %arg1: i32) -> (i32, i32, i32) {
    %c0_i32 = arith.constant 0 : i32
    %c0_i32_0 = arith.constant 0 : i32
    %c0_i32_1 = arith.constant 0 : i32
    return %arg0, %c0_i32, %c0_i32_0 : i32, i32, i32
  }
  func.func @transform_3(%arg0: i32, %arg1: i32) -> (i32, i32) {
    %c0_i32 = arith.constant 0 : i32
    %c0_i32_0 = arith.constant 0 : i32
    %c0_i32_1 = arith.constant 0 : i32
    return %c0_i32, %c0_i32_0 : i32, i32
  }
  func.func @transform_4(%arg0: i32, %arg1: i32) -> (i32, i32) {
    %c0_i32 = arith.constant 0 : i32
    %c0_i32_0 = arith.constant 0 : i32
    return %c0_i32, %arg1 : i32, i32
  }
  func.func @transform_5(%arg0: i32, %arg1: i32) -> (i32, i32, i32) {
    %c0_i32 = arith.constant 0 : i32
    %c0_i32_0 = arith.constant 0 : i32
    return %arg0, %c0_i32, %arg1 : i32, i32, i32
  }
  func.func @transform_6(%arg0: i32, %arg1: i32) -> (i32, i32, i32) {
    %c0_i32 = arith.constant 0 : i32
    %c0_i32_0 = arith.constant 0 : i32
    return %arg0, %c0_i32, %arg1 : i32, i32, i32
  }
}

</mosaic_0001>

<llo_original>
// kernel: tpu_custom_call.1
$region0: #{tpu_custom_call.1}
  #allocation0 [shape = 'u32[]', space=smem, size = 0x4, offset = 0x4, fixed_abs, tag = 'smem constant byte address 0x4 - core index']
  #allocation1 [shape = 'u32[144,128]{1,0:T(1,128)}', space=vmem, size = 0x12000, scoped, tag = 'internal scratch']
  %s0 = inlined_call_operand.vmem [shape: f32[2,3,128], index: 0, kind: input, shape index: {}]
  %s1 = inlined_call_operand.vmem [shape: f32[32,8], index: 1, kind: input, shape index: {}]
  %s2 = inlined_call_operand.vmem [shape: f32[2,8,1], index: 2, kind: input, shape index: {}]
  %s3 = inlined_call_operand.vmem [shape: bf16[32,8], index: 3, kind: input, shape index: {}]
  %s4 = inlined_call_operand.vmem [shape: s32[1,128], index: 4, kind: input, shape index: {}]
  %s5 = inlined_call_operand.hbm [shape: s32[2,8,128], index: 5, kind: output, shape index: {0}]
  %s6 = inlined_call_operand.hbm [shape: f32[2,24,128], index: 6, kind: output, shape index: {1}]
  %7 = xla_tuple %s5, %s6
  %s8 = sld [smem:[#allocation0]]
  $region61: #{tpu_custom_call.1} parent=0
    _
  %s10 = ssub.s32 1, %s8
  %s11 = scalar_select 0, %s10, %s8
  $region1: #{tpu_custom_call.1} parent=0
    #allocation2 [shape = 'u8[8192]{0}', space=vmem, size = 0x2000, scoped, tag = 'output window, operand 0']
    #allocation3 [shape = 's32[2]{0}', space=sflag, size = 0x8, scoped, tag = 'scoped memory for tpu_custom_call.1']
    #allocation4 [shape = 'u8[24576]{0}', space=vmem, size = 0x6000, scoped, tag = 'output window, operand 1']
    #allocation5 [shape = 's32[2]{0}', space=sflag, size = 0x8, scoped, tag = 'scoped memory for tpu_custom_call.1']
    %12 = vsyncpa [#allocation3], 0
    %s13 = scalar_lea.sflag [#allocation3], 1
    %14 = vsyncpa %s13, 0
    %15 = vsyncpa [#allocation5], 0
    %s16 = scalar_lea.sflag [#allocation5], 1
    %17 = vsyncpa %s16, 0
    loop: start=0, step=1, limit=4
    $region2: #{tpu_custom_call.1} parent=1 // loop_pre_header
      _
    $region3: #{tpu_custom_call.1} parent=1 // loop_header
      %s19 = sphi 0, %s23
      %p20 = scmp.ge.s32.totalorder %s19, 4
      %s26 = sphi 0, %s38
      %s27 = sphi 0, %s34
      %s28 = sphi 0, %s26
      %s29 = sphi 0, %s27
      %s30 = sphi 0, %s28
      %s31 = sphi 0, %s29
      %s43 = sphi 0, %s45
      %s46 = sphi 0, %s43
      %s47 = sphi 0, %s46
      %s63 = sphi 0, %s47
      %s67 = sphi 0, %s67
      %s69 = sphi 0, %s67
      %s70 = sphi 0, %s69
      %s84 = sphi 0, %s70
      %s90 = sphi 0, %s92
      %s93 = sphi 0, %s90
      %s94 = sphi 0, %s93
      %s110 = sphi 0, %s94
      %s114 = sphi 0, %s114
      %s116 = sphi 0, %s114
      %s117 = sphi 0, %s116
      %s131 = sphi 0, %s117
      %s137 = sphi 0, %s139
      %s140 = sphi 0, %s137
      %s141 = sphi 0, %s140
      %s157 = sphi 0, %s141
      %s165 = sphi 0, %s167
      %s168 = sphi 0, %s165
      %s169 = sphi 0, %s168
      %s185 = sphi 0, %s169
      %s193 = sphi 0, %s195
      %s196 = sphi 0, %s193
      %s197 = sphi 0, %s196
      %s213 = sphi 0, %s197
    $region4: #{tpu_custom_call.1} parent=1 // loop_header_branch
      %22 = sbr.rel (%p20) target = $region8
    $region5: #{tpu_custom_call.1} parent=1 // loop_body
      %s24 = ssub.s32 %s19, 1
      %s25 = ssub.s32 %s19, 2
      %s32 = sadd.s32 1, %s27
      %p33 = scmp.ge.s32.totalorder %s32, 1
      %s34 = scalar_select %p33, 0, %s32
      %s35 = sadd.s32 1, %s26
      %s36 = scalar_select %p33, %s35, %s26
      %p37 = scmp.ge.s32.totalorder %s36, 2
      %s38 = scalar_select %p37, 0, %s36
      %s39 = ssub.s32 %s26, %s38
      %s40 = ssub.s32 %s27, %s34
      %s41 = sor.u32 %s39, %s40
      %p42 = scmp.eq.s32.totalorder %s41, 0
      %s44 = sadd.s32 %s43, 1
      %s45 = scalar_select %p42, %s43, %s44
      %p48 = pneg %p42
      %p49 = scmp.eq.s32.totalorder %s19, 1
      %p50 = por %p48, %p49
      %p51 = scmp.ne.s32.totalorder %s43, %s46
      %p52 = scmp.eq.s32.totalorder %s19, 0
      %p53 = por %p51, %p52
      %p54 = scmp.ne.s32.totalorder %s43, %s46
      %p55 = scmp.eq.s32.totalorder %s24, 1
      %p56 = por %p54, %p55
      %p57 = scmp.ne.s32.totalorder %s46, %s47
      %p58 = scmp.eq.s32.totalorder %s24, 0
      %p59 = por %p57, %p58
      %p60 = scmp.ne.s32.totalorder %s46, %s47
      %p61 = scmp.eq.s32.totalorder %s25, 1
      %p62 = por %p60, %p61
      %p64 = scmp.ne.s32.totalorder %s47, %s63
      %p65 = scmp.eq.s32.totalorder %s25, 0
      %p66 = por %p64, %p65
      %s68 = sadd.s32 %s67, 1
      %p71 = scmp.eq.s32.totalorder %s19, 1
      %p72 = scmp.ne.s32.totalorder %s67, %s69
      %p73 = scmp.eq.s32.totalorder %s19, 0
      %p74 = por %p72, %p73
      %p75 = scmp.ne.s32.totalorder %s67, %s69
      %p76 = scmp.eq.s32.totalorder %s24, 1
      %p77 = por %p75, %p76
      %p78 = scmp.ne.s32.totalorder %s69, %s70
      %p79 = scmp.eq.s32.totalorder %s24, 0
      %p80 = por %p78, %p79
      %p81 = scmp.ne.s32.totalorder %s69, %s70
      %p82 = scmp.eq.s32.totalorder %s25, 1
      %p83 = por %p81, %p82
      %p85 = scmp.ne.s32.totalorder %s70, %s84
      %p86 = scmp.eq.s32.totalorder %s25, 0
      %p87 = por %p85, %p86
      %s88 = ssub.s32 %s26, %s38
      %p89 = scmp.eq.s32.totalorder %s88, 0
      %s91 = sadd.s32 %s90, 1
      %s92 = scalar_select %p89, %s90, %s91
      %p95 = pneg %p89
      %p96 = scmp.eq.s32.totalorder %s19, 1
      %p97 = por %p95, %p96
      %p98 = scmp.ne.s32.totalorder %s90, %s93
      %p99 = scmp.eq.s32.totalorder %s19, 0
      %p100 = por %p98, %p99
      %p101 = scmp.ne.s32.totalorder %s90, %s93
      %p102 = scmp.eq.s32.totalorder %s24, 1
      %p103 = por %p101, %p102
      %p104 = scmp.ne.s32.totalorder %s93, %s94
      %p105 = scmp.eq.s32.totalorder %s24, 0
      %p106 = por %p104, %p105
      %p107 = scmp.ne.s32.totalorder %s93, %s94
      %p108 = scmp.eq.s32.totalorder %s25, 1
      %p109 = por %p107, %p108
      %p111 = scmp.ne.s32.totalorder %s94, %s110
      %p112 = scmp.eq.s32.totalorder %s25, 0
      %p113 = por %p111, %p112
      %s115 = sadd.s32 %s114, 1
      %p118 = scmp.eq.s32.totalorder %s19, 1
      %p119 = scmp.ne.s32.totalorder %s114, %s116
      %p120 = scmp.eq.s32.totalorder %s19, 0
      %p121 = por %p119, %p120
      %p122 = scmp.ne.s32.totalorder %s114, %s116
      %p123 = scmp.eq.s32.totalorder %s24, 1
      %p124 = por %p122, %p123
      %p125 = scmp.ne.s32.totalorder %s116, %s117
      %p126 = scmp.eq.s32.totalorder %s24, 0
      %p127 = por %p125, %p126
      %p128 = scmp.ne.s32.totalorder %s116, %s117
      %p129 = scmp.eq.s32.totalorder %s25, 1
      %p130 = por %p128, %p129
      %p132 = scmp.ne.s32.totalorder %s117, %s131
      %p133 = scmp.eq.s32.totalorder %s25, 0
      %p134 = por %p132, %p133
      %s135 = ssub.s32 %s27, %s34
      %p136 = scmp.eq.s32.totalorder %s135, 0
      %s138 = sadd.s32 %s137, 1
      %s139 = scalar_select %p136, %s137, %s138
      %p142 = pneg %p136
      %p143 = scmp.eq.s32.totalorder %s19, 1
      %p144 = por %p142, %p143
      %p145 = scmp.ne.s32.totalorder %s137, %s140
      %p146 = scmp.eq.s32.totalorder %s19, 0
      %p147 = por %p145, %p146
      %p148 = scmp.ne.s32.totalorder %s137, %s140
      %p149 = scmp.eq.s32.totalorder %s24, 1
      %p150 = por %p148, %p149
      %p151 = scmp.ne.s32.totalorder %s140, %s141
      %p152 = scmp.eq.s32.totalorder %s24, 0
      %p153 = por %p151, %p152
      %p154 = scmp.ne.s32.totalorder %s140, %s141
      %p155 = scmp.eq.s32.totalorder %s25, 1
      %p156 = por %p154, %p155
      %p158 = scmp.ne.s32.totalorder %s141, %s157
      %p159 = scmp.eq.s32.totalorder %s25, 0
      %p160 = por %p158, %p159
      %s161 = ssub.s32 %s26, %s38
      %s162 = ssub.s32 %s27, %s34
      %s163 = sor.u32 %s161, %s162
      %p164 = scmp.eq.s32.totalorder %s163, 0
      %s166 = sadd.s32 %s165, 1
      %s167 = scalar_select %p164, %s165, %s166
      %p170 = pneg %p164
      %p171 = scmp.eq.s32.totalorder %s19, 1
      %p172 = por %p170, %p171
      %p173 = scmp.ne.s32.totalorder %s165, %s168
      %p174 = scmp.eq.s32.totalorder %s19, 0
      %p175 = por %p173, %p174
      %p176 = scmp.ne.s32.totalorder %s165, %s168
      %p177 = scmp.eq.s32.totalorder %s24, 1
      %p178 = por %p176, %p177
      %p179 = scmp.ne.s32.totalorder %s168, %s169
      %p180 = scmp.eq.s32.totalorder %s24, 0
      %p181 = por %p179, %p180
      %p182 = scmp.ne.s32.totalorder %s168, %s169
      %p183 = scmp.eq.s32.totalorder %s25, 1
      %p184 = por %p182, %p183
      %p186 = scmp.ne.s32.totalorder %s169, %s185
      %p187 = scmp.eq.s32.totalorder %s25, 0
      %p188 = por %p186, %p187
      %s189 = ssub.s32 %s26, %s38
      %s190 = ssub.s32 %s27, %s34
      %s191 = sor.u32 %s189, %s190
      %p192 = scmp.eq.s32.totalorder %s191, 0
      %s194 = sadd.s32 %s193, 1
      %s195 = scalar_select %p192, %s193, %s194
      %p198 = pneg %p192
      %p199 = scmp.eq.s32.totalorder %s19, 1
      %p200 = por %p198, %p199
      %p201 = scmp.ne.s32.totalorder %s193, %s196
      %p202 = scmp.eq.s32.totalorder %s19, 0
      %p203 = por %p201, %p202
      %p204 = scmp.ne.s32.totalorder %s193, %s196
      %p205 = scmp.eq.s32.totalorder %s24, 1
      %p206 = por %p204, %p205
      %p207 = scmp.ne.s32.totalorder %s196, %s197
      %p208 = scmp.eq.s32.totalorder %s24, 0
      %p209 = por %p207, %p208
      %p210 = scmp.ne.s32.totalorder %s196, %s197
      %p211 = scmp.eq.s32.totalorder %s25, 1
      %p212 = por %p210, %p211
      %p214 = scmp.ne.s32.totalorder %s197, %s213
      %p215 = scmp.eq.s32.totalorder %s25, 0
      %p216 = por %p214, %p215
      %p217 = scmp.le.s32.totalorder 1, %s19
      %p218 = scmp.lt.s32.totalorder %s19, 3
      %p219 = pnand %p217, %p218
      %p220 = pneg %p219
      // Predicated region
      $region9: #{tpu_custom_call.1} parent=5 // pred_check
        _
      $region10: #{tpu_custom_call.1} parent=5 // pred_check_branch
        %222 = sbr.rel (%p219) target = $region12
      $region11: #{tpu_custom_call.1} parent=5 // pred_region
        %s223 = ssub.s32 %s19, 1
        // Predicated region
        $region13: #{tpu_custom_call.1} parent=11 // pred_check
          %p224 = pneg %p80
        $region14: #{tpu_custom_call.1} parent=11 // pred_check_branch
          %226 = sbr.rel (%p224) target = $region16
        $region15: #{tpu_custom_call.1} parent=11 // pred_region
          _
        $region16: #{tpu_custom_call.1} parent=11 // pred_fallthru
          _
        // Predicated region
        $region17: #{tpu_custom_call.1} parent=11 // pred_check
          %p227 = pneg %p127
        $region18: #{tpu_custom_call.1} parent=11 // pred_check_branch
          %229 = sbr.rel (%p227) target = $region20
        $region19: #{tpu_custom_call.1} parent=11 // pred_region
          _
        $region20: #{tpu_custom_call.1} parent=11 // pred_fallthru
          _
        // Predicated region
        $region21: #{tpu_custom_call.1} parent=11 // pred_check
          %p230 = pneg %p153
        $region22: #{tpu_custom_call.1} parent=11 // pred_check_branch
          %232 = sbr.rel (%p230) target = $region24
        $region23: #{tpu_custom_call.1} parent=11 // pred_region
          %p233 = scmp.lt.s32.totalorder %s29, 0
          %s234 = scalar_select %p233, %s29, 0
          %s235 = scalar_lea.vmem %s4, %s234
        $region24: #{tpu_custom_call.1} parent=11 // pred_fallthru
          _
      $region12: #{tpu_custom_call.1} parent=5 // pred_fallthru
        _
      %p236 = scmp.lt.s32.totalorder %s19, 2
      // Predicated region
      $region25: #{tpu_custom_call.1} parent=5 // pred_check
        %p237 = pneg %p236
      $region26: #{tpu_custom_call.1} parent=5 // pred_check_branch
        %239 = sbr.rel (%p237) target = $region28
      $region27: #{tpu_custom_call.1} parent=5 // pred_region
        // Predicated region
        $region29: #{tpu_custom_call.1} parent=27 // pred_check
          %p240 = pneg %p53
        $region30: #{tpu_custom_call.1} parent=27 // pred_check_branch
          %242 = sbr.rel (%p240) target = $region32
        $region31: #{tpu_custom_call.1} parent=27 // pred_region
          %p243 = scmp.lt.s32.totalorder %s26, 1
          %s244 = scalar_select %p243, %s26, 1
          %p245 = scmp.lt.s32.totalorder %s27, 0
          %s246 = scalar_select %p245, %s27, 0
          %s247 = sadd.s32 %s246, %s244
          %s248 = smul.addr %s247, 4
          %s249 = scalar_lea.vmem %s0, %s248
        $region32: #{tpu_custom_call.1} parent=27 // pred_fallthru
          _
        // Predicated region
        $region33: #{tpu_custom_call.1} parent=27 // pred_check
          %p250 = pneg %p100
        $region34: #{tpu_custom_call.1} parent=27 // pred_check_branch
          %252 = sbr.rel (%p250) target = $region36
        $region35: #{tpu_custom_call.1} parent=27 // pred_region
          %p253 = scmp.lt.s32.totalorder %s26, 1
          %s254 = scalar_select %p253, %s26, 1
          %s255 = smul.addr %s254, 8
          %s256 = scalar_lea.vmem %s2, %s255
        $region36: #{tpu_custom_call.1} parent=27 // pred_fallthru
          _
      $region28: #{tpu_custom_call.1} parent=5 // pred_fallthru
        _
      %p257 = scmp.le.s32.totalorder 1, %s19
      %p258 = scmp.lt.s32.totalorder %s19, 3
      %p259 = pnand %p257, %p258
      %p260 = pneg %p259
      // Predicated region
      $region37: #{tpu_custom_call.1} parent=5 // pred_check
        _
      $region38: #{tpu_custom_call.1} parent=5 // pred_check_branch
        %262 = sbr.rel (%p259) target = $region40
      $region39: #{tpu_custom_call.1} parent=5 // pred_region
        %s263 = ssub.s32 %s19, 1
        %p264 = scmp.lt.s32.totalorder %s28, 1
        %s265 = scalar_select %p264, %s28, 1
        %p266 = scmp.lt.s32.totalorder %s29, 0
        %s267 = scalar_select %p266, %s29, 0
        %s268 = sadd.s32 %s267, %s265
        %s269 = smul.addr %s268, 4
        %s270 = scalar_lea.vmem %s0, %s269
        %p271 = pneg %p59
        %p272 = pneg %p56
        %p273 = pneg %p80
        %p274 = pneg %p77
        %p275 = scmp.lt.s32.totalorder %s28, 1
        %s276 = scalar_select %p275, %s28, 1
        %s277 = smul.addr %s276, 8
        %s278 = scalar_lea.vmem %s2, %s277
        %p279 = pneg %p106
        %p280 = pneg %p103
        %p281 = pneg %p127
        %p282 = pneg %p124
        %p283 = scmp.lt.s32.totalorder %s29, 0
        %s284 = scalar_select %p283, %s29, 0
        %s285 = scalar_lea.vmem %s4, %s284
        %p286 = pneg %p153
        %p287 = pneg %p150
        %p288 = pneg %p181
        %p289 = pneg %p178
        %s290 = sand.u32 %s168, 1
        %s291 = scalar_lea.sflag [#allocation3], %s290
        %s292 = sand.u32 %s168, 1
        %s293 = smul.addr %s292, 8
        %s294 = scalar_lea.vmem [#allocation2], %s293
        %p295 = pneg %p209
        %p296 = pneg %p206
        %s297 = sand.u32 %s196, 1
        %s298 = scalar_lea.sflag [#allocation5], %s297
        %s299 = sand.u32 %s196, 1
        %s300 = smul.addr %s299, 24
        %s301 = scalar_lea.vmem [#allocation4], %s300
        %p302 = scmp.lt.s32.totalorder %s28, 1
        %s303 = scalar_select %p302, %s28, 1
        %p304 = scmp.lt.s32.totalorder %s29, 0
        %s305 = scalar_select %p304, %s29, 0
        %s306 = sadd.s32 %s305, %s303
        %s307 = smul.addr %s306, 4
        %s308 = scalar_lea.vmem %s0, %s307
        %p309 = scmp.lt.s32.totalorder %s28, 1
        %s310 = scalar_select %p309, %s28, 1
        %s311 = smul.addr %s310, 8
        %s312 = scalar_lea.vmem %s2, %s311
        %p313 = scmp.lt.s32.totalorder %s29, 0
        %s314 = scalar_select %p313, %s29, 0
        %s315 = scalar_lea.vmem %s4, %s314
        %v317 = vld [vmem:[%s308] sm:$0x7]
        %v318 = vmul.f32 %v317, %v317
        %v320 = vrot.slane %v318, 1
        %v322 = vadd.f32 %v318, %v320
        %v323 = vrot.slane %v318, 2
        %v325 = vadd.f32 %v322, %v323
        %v327 = vrot.slane %v325, 4
        %vm329 = vcmask 1042432
        %v330 = vsel %vm329, %v317, 1.0
        %vm331 = vcmask 1043456
        %v332 = vsel %vm331, %v330, %v327
        %vm333 = vcmask 1044480
        %v334 = vsel %vm333, %v332, 0.0
        %v335 = vld [vmem:[%s1] sm:$0xff]
        %v336 = vld [vmem:[%s1 + $0x8] sm:$0xff]
        %v337 = vld [vmem:[%s1 + $0x10] sm:$0xff]
        %v338 = vld [vmem:[%s1 + $0x18] sm:$0xff]
        %vm339 = vcmask 64512
        %v341 = vsel %vm339, %v335, 0
        %v344 = vsel %vm339, %v336, 0
        %v347 = vsel %vm339, %v337, 0
        %v350 = vsel %vm339, %v338, 0
        %352 = vmatprep.subr.mxu0 0.0
        %353 = vmatpush1.msra.mxu0 0.0
        %354 = vmatprep.subr.mxu0 0.0
        %355 = vmatpush1.msra.mxu0 0.0
        %356 = vmatprep.subr.mxu0 0.0
        %357 = vmatpush1.msra.mxu0 0.0
        %358 = vmatprep.subr.mxu0 0.0
        %359 = vmatpush1.msra.mxu0 0.0
        %360 = vmatprep.subr.mxu0 0.0
        %361 = vmatpush1.msra.mxu0 0.0
        %362 = vmatprep.subr.mxu0 0.0
        %363 = vmatpush1.msra.mxu0 0.0
        %364 = vmatprep.subr.mxu0 0.0
        %365 = vmatpush1.msra.mxu0 0.0
        %366 = vmatprep.subr.mxu0 0.0
        %367 = vmatpush1.msra.mxu0 0.0
        %368 = vmatprep.subr.mxu0 0.0
        %369 = vmatpush1.msra.mxu0 0.0
        %370 = vmatprep.subr.mxu0 0.0
        %371 = vmatpush1.msra.mxu0 0.0
        %372 = vmatprep.subr.mxu0 0.0
        %373 = vmatpush1.msra.mxu0 0.0
        %374 = vmatprep.subr.mxu0 0.0
        %375 = vmatpush1.msra.mxu0 0.0
        %376 = vmatprep.subr.mxu0 0.0
        %377 = vmatpush1.msra.mxu0 0.0
        %378 = vmatprep.subr.mxu0 0.0
        %379 = vmatpush1.msra.mxu0 0.0
        %380 = vmatprep.subr.mxu0 0.0
        %381 = vmatpush1.msra.mxu0 0.0
        %382 = vmatprep.subr.mxu0 0.0
        %383 = vmatpush1.msra.mxu0 %v334
        %384 = vmatprep.subr.mxu0 0.0
        %385 = vmatpush2.msra.mxu0 0.0
        %386 = vmatprep.subr.mxu0 0.0
        %387 = vmatpush2.msra.mxu0 0.0
        %388 = vmatprep.subr.mxu0 0.0
        %389 = vmatpush2.msra.mxu0 0.0
        %390 = vmatprep.subr.mxu0 0.0
        %391 = vmatpush2.msra.mxu0 0.0
        %392 = vmatprep.subr.mxu0 0.0
        %393 = vmatpush2.msra.mxu0 0.0
        %394 = vmatprep.subr.mxu0 0.0
        %395 = vmatpush2.msra.mxu0 0.0
        %396 = vmatprep.subr.mxu0 0.0
        %397 = vmatpush2.msra.mxu0 0.0
        %398 = vmatprep.subr.mxu0 0.0
        %399 = vmatpush2.msra.mxu0 0.0
        %400 = vmatprep.subr.mxu0 0.0
        %401 = vmatpush2.msra.mxu0 0.0
        %402 = vmatprep.subr.mxu0 0.0
        %403 = vmatpush2.msra.mxu0 0.0
        %404 = vmatprep.subr.mxu0 0.0
        %405 = vmatpush2.msra.mxu0 0.0
        %406 = vmatprep.subr.mxu0 0.0
        %407 = vmatpush2.msra.mxu0 0.0
        %408 = vmatprep.subr.mxu0 0.0
        %409 = vmatpush2.msra.mxu0 0.0
        %410 = vmatprep.subr.mxu0 0.0
        %411 = vmatpush2.msra.mxu0 0.0
        %412 = vmatprep.subr.mxu0 0.0
        %413 = vmatpush2.msra.mxu0 0.0
        %414 = vmatprep.subr.mxu0 0.0
        %415 = vmatpush2.msra.mxu0 0.0
        %416 = vmatprep.mubr.f32.mxu0 0.0
        %417 = vmatmul.mubr.f32.gmra.mxu0 %v341
        %v418 = vpop.f32.mrf.mxu0
        %v419 = vadd.f32 0.0, %v418
        %v420 = vpop.f32.mrf.mxu0
        %421 = vmatprep.mubr.f32.mxu0 0.0
        %422 = vmatmul.mubr.f32.gmra.mxu0 %v344
        %v423 = vpop.f32.mrf.mxu0
        %v424 = vadd.f32 0.0, %v423
        %v425 = vpop.f32.mrf.mxu0
        %426 = vmatprep.mubr.f32.mxu0 0.0
        %427 = vmatmul.mubr.f32.gmra.mxu0 %v347
        %v428 = vpop.f32.mrf.mxu0
        %v429 = vadd.f32 0.0, %v428
        %v430 = vpop.f32.mrf.mxu0
        %431 = vmatprep.mubr.f32.mxu0 0.0
        %432 = vmatmul.mubr.f32.gmra.mxu0 %v350
        %v433 = vpop.f32.mrf.mxu0
        %v434 = vadd.f32 0.0, %v433
        %v435 = vpop.f32.mrf.mxu0
        %436 = vdwg.mxu0
        %v437 = vld [vmem:[%s312] sm:$0xff]
        %vm438 = vcmp.lt.f32.partialorder %v419, 0.0
        %vm439 = vcmp.gt.f32.partialorder %v437, 0.0
        %v440 = vsel %vm439, 1, 0
        %441 = vset.pattern.permute.xlu0 0
        %442 = vperm.xlu0 %441, %v440
        %v443 = vpop.permute.xlu0 %442
        %vm444 = vcmp.eq.s32.totalorder %v443, 1
        %vm445 = vmand %vm438, %vm444
        %v446 = vsel %vm445, 1.0, 0.0
        %v447 = vpack.c.bf16 %v446, %v446
        %v448 = vld [vmem:[%s3] sm:$0xf]
        %v449 = vld [vmem:[%s3 + $0x4] sm:$0xf]
        %v450 = vld [vmem:[%s3 + $0x8] sm:$0xf]
        %v451 = vld [vmem:[%s3 + $0xc] sm:$0xf]
        %v456 = vunpack.c.l.b16 %v448
        %v457 = vunpack.c.l.b16 %v449
        %v458 = vunpack.c.l.b16 %v450
        %v459 = vunpack.c.l.b16 %v451
        %v460 = vpack.c.b16 %v457, %v456
        %v461 = vpack.c.b16 %v459, %v458
        %v463 = vsel %vm339, %v460, 0
        %v466 = vsel %vm339, %v461, 0
        %v469 = vsel %vm331, %v447, 0
        %471 = vmatprep.subr.bf16.mxu0 0
        %472 = vmatpush1.bf16.msra.mxu0 0
        %473 = vmatprep.subr.bf16.mxu0 0
        %474 = vmatpush1.bf16.msra.mxu0 0
        %475 = vmatprep.subr.bf16.mxu0 0
        %476 = vmatpush1.bf16.msra.mxu0 0
        %477 = vmatprep.subr.bf16.mxu0 0
        %478 = vmatpush1.bf16.msra.mxu0 0
        %479 = vmatprep.subr.bf16.mxu0 0
        %480 = vmatpush1.bf16.msra.mxu0 0
        %481 = vmatprep.subr.bf16.mxu0 0
        %482 = vmatpush1.bf16.msra.mxu0 0
        %483 = vmatprep.subr.bf16.mxu0 0
        %484 = vmatpush1.bf16.msra.mxu0 0
        %485 = vmatprep.subr.bf16.mxu0 0
        %486 = vmatpush1.bf16.msra.mxu0 %v469
        %487 = vmatprep.subr.bf16.mxu0 0
        %488 = vmatpush2.bf16.msra.mxu0 0
        %489 = vmatprep.subr.bf16.mxu0 0
        %490 = vmatpush2.bf16.msra.mxu0 0
        %491 = vmatprep.subr.bf16.mxu0 0
        %492 = vmatpush2.bf16.msra.mxu0 0
        %493 = vmatprep.subr.bf16.mxu0 0
        %494 = vmatpush2.bf16.msra.mxu0 0
        %495 = vmatprep.subr.bf16.mxu0 0
        %496 = vmatpush2.bf16.msra.mxu0 0
        %497 = vmatprep.subr.bf16.mxu0 0
        %498 = vmatpush2.bf16.msra.mxu0 0
        %499 = vmatprep.subr.bf16.mxu0 0
        %500 = vmatpush2.bf16.msra.mxu0 0
        %501 = vmatprep.subr.bf16.mxu0 0
        %502 = vmatpush2.bf16.msra.mxu0 0
        %503 = vmatprep.mubr.bf16.mxu0 0
        %504 = vmatmul.mubr.bf16.gmra.mxu0 %v463
        %v505 = vpop.f32.mrf.mxu0
        %v506 = vadd.f32 0.0, %v505
        %v507 = vpop.f32.mrf.mxu0
        %v508 = vpop.f32.mrf.mxu0
        %v509 = vadd.f32 0.0, %v508
        %v510 = vpop.f32.mrf.mxu0
        %511 = vmatprep.mubr.bf16.mxu0 0
        %512 = vmatmul.mubr.bf16.gmra.mxu0 %v466
        %v513 = vpop.f32.mrf.mxu0
        %v514 = vadd.f32 0.0, %v513
        %v515 = vpop.f32.mrf.mxu0
        %v516 = vpop.f32.mrf.mxu0
        %v517 = vadd.f32 0.0, %v516
        %v518 = vpop.f32.mrf.mxu0
        %519 = vdwg.mxu0
        %vm520 = vcmp.gt.f32.partialorder %v506, 0.5
        %vm521 = vcmp.gt.f32.partialorder %v509, 0.5
        %vm522 = vcmp.gt.f32.partialorder %v514, 0.5
        %vm523 = vcmp.gt.f32.partialorder %v517, 0.5
        %v524 = vsel %vm521, 1, 0
        %v525 = vsel %vm522, 1, 0
        %v526 = vsel %vm523, 1, 0
        %v527 = vcvt.s32.f32 %v524
        %v528 = vcvt.s32.f32 %v525
        %v529 = vcvt.s32.f32 %v526
        %v530 = vld [vmem:[%s315] sm:$0x1]
        %vm531 = vcmp.ne.s32.totalorder %v530, 0
        %vm532 = vmxor %vm520, 1
        %v533 = vsel %vm532, 1, 0
        %v535 = vunpack.c.l.s4 1966171168
        %v536 = vunpack.c.0.s8 %v535
        %v537 = vlaneseq
        %v538 = vshrl.u32 %v537, 7
        %v539 = vsub.s32 %v536, %v538
        %v540 = vrot.slane %v533, %v539
        %v541 = vcombine.high %v540, %v540
        %v543 = vunpack.c.l.s4 1966171168
        %v544 = vunpack.c.0.s8 %v543
        %v545 = vlaneseq
        %v546 = vshrl.u32 %v545, 7
        %v547 = vsub.s32 %v544, %v546
        %v548 = vrot.slane %v541, %v547
        %v549 = vcombine.high %v548, %v548
        %vm550 = vcmp.ne.s32.totalorder %v549, 0
        %vm551 = vmand %vm531, %vm550
        %v552 = vsel %vm520, 1, 0
        %v554 = vunpack.c.l.s4 1966171168
        %v555 = vunpack.c.0.s8 %v554
        %v556 = vlaneseq
        %v557 = vshrl.u32 %v556, 7
        %v558 = vsub.s32 %v555, %v557
        %v559 = vrot.slane %v552, %v558
        %v560 = vcombine.high %v559, %v559
        %v562 = vunpack.c.l.s4 1966171168
        %v563 = vunpack.c.0.s8 %v562
        %v564 = vlaneseq
        %v565 = vshrl.u32 %v564, 7
        %v566 = vsub.s32 %v563, %v565
        %v567 = vrot.slane %v560, %v566
        %v568 = vcombine.high %v567, %v567
        %vm569 = vcmp.ne.s32.totalorder %v568, 0
        %vm570 = vmor %vm531, %vm569
        %vm571 = vmxor %vm570, 1
        %v572 = vsel %vm551, 1, 0
        %v573 = vsel %vm571, 1, 0
        %v574 = vlaneseq
        %v575 = vshrl.u32 %v574, 7
        %v576 = vsub.s32 0, %v575
        %v577 = vrot.slane %v572, %v576
        %v578 = vlaneseq
        %v579 = vshrl.u32 %v578, 7
        %v580 = vsub.s32 0, %v579
        %v581 = vrot.slane %v573, %v580
        %v582 = vsel %vm329, %v552, %v577
        %v583 = vsel %vm331, %v582, %v581
        %v584 = vsel %vm333, %v583, 0
        %585 = vst [vmem:[%s294] sm:$0xff] %v584
        %v586 = vmul.f32 %v527, %v424
        %v587 = vmul.f32 %v528, %v429
        %v588 = vmul.f32 %v529, %v434
        %589 = vst [vmem:[%s301] sm:$0xff] %v586
        %590 = vst [vmem:[%s301 + $0x8] sm:$0xff] %v587
        %591 = vst [vmem:[%s301 + $0x10] sm:$0xff] %v588
        %s592 = sand.u32 %s168, 1
        %s593 = scalar_lea.sflag [#allocation3], %s592
        %s594 = sand.u32 %s168, 1
        %s595 = smul.addr %s594, 8
        %s596 = scalar_lea.vmem [#allocation2], %s595
        %s597 = sand.u32 %s196, 1
        %s598 = scalar_lea.sflag [#allocation5], %s597
        %s599 = sand.u32 %s196, 1
        %s600 = smul.addr %s599, 24
        %s601 = scalar_lea.vmem [#allocation4], %s600
        // Predicated region
        $region41: #{tpu_custom_call.1} parent=39 // pred_check
          %p602 = pneg %p178
        $region42: #{tpu_custom_call.1} parent=39 // pred_check_branch
          %604 = sbr.rel (%p602) target = $region44
        $region43: #{tpu_custom_call.1} parent=39 // pred_region
          %s606 = ssub.s32 128, 128
          %607 = vsyncadd %s593, %s606
          %s608 = sadd.s32 %s29, %s28
          %s609 = smul.addr %s608, 128
          %s610 = scalar_lea.hbm %s5, %s609
          %s612 = sshll.u32 %s596, 4
          %s613 = int_to_ptr.vmem [resolvable:$true] %s612
          %615 = dma.vmem_to_hbm [thread:$0]  %s613, 128, %s610, %s593
        $region44: #{tpu_custom_call.1} parent=39 // pred_fallthru
          _
        // Predicated region
        $region45: #{tpu_custom_call.1} parent=39 // pred_check
          %p616 = pneg %p206
        $region46: #{tpu_custom_call.1} parent=39 // pred_check_branch
          %618 = sbr.rel (%p616) target = $region48
        $region47: #{tpu_custom_call.1} parent=39 // pred_region
          %s620 = ssub.s32 384, 384
          %621 = vsyncadd %s598, %s620
          %s622 = smul.addr %s28, 3
          %s623 = sadd.s32 %s29, %s622
          %s624 = smul.addr %s623, 128
          %s625 = scalar_lea.hbm %s6, %s624
          %s626 = sshll.u32 %s601, 4
          %s627 = int_to_ptr.vmem [resolvable:$true] %s626
          %632 = dma.vmem_to_hbm [thread:$0]  %s627, 384, %s625, %s598, 128, 128, 8
        $region48: #{tpu_custom_call.1} parent=39 // pred_fallthru
          _
      $region40: #{tpu_custom_call.1} parent=5 // pred_fallthru
        _
      %p633 = scmp.le.s32.totalorder 2, %s19
      // Predicated region
      $region49: #{tpu_custom_call.1} parent=5 // pred_check
        %p634 = pneg %p633
      $region50: #{tpu_custom_call.1} parent=5 // pred_check_branch
        %636 = sbr.rel (%p634) target = $region52
      $region51: #{tpu_custom_call.1} parent=5 // pred_region
        %s637 = ssub.s32 %s19, 2
        // Predicated region
        $region53: #{tpu_custom_call.1} parent=51 // pred_check
          %p638 = pneg %p184
        $region54: #{tpu_custom_call.1} parent=51 // pred_check_branch
          %640 = sbr.rel (%p638) target = $region56
        $region55: #{tpu_custom_call.1} parent=51 // pred_region
          %s641 = sand.u32 %s169, 1
          %s642 = scalar_lea.sflag [#allocation3], %s641
          %s643 = sand.u32 %s169, 1
          %s644 = smul.addr %s643, 8
          %s645 = scalar_lea.vmem [#allocation2], %s644
          %646 = dma.done %s642, 128
        $region56: #{tpu_custom_call.1} parent=51 // pred_fallthru
          _
        // Predicated region
        $region57: #{tpu_custom_call.1} parent=51 // pred_check
          %p647 = pneg %p212
        $region58: #{tpu_custom_call.1} parent=51 // pred_check_branch
          %649 = sbr.rel (%p647) target = $region60
        $region59: #{tpu_custom_call.1} parent=51 // pred_region
          %s650 = sand.u32 %s197, 1
          %s651 = scalar_lea.sflag [#allocation5], %s650
          %s652 = sand.u32 %s197, 1
          %s653 = smul.addr %s652, 24
          %s654 = scalar_lea.vmem [#allocation4], %s653
          %655 = dma.done %s651, 384
        $region60: #{tpu_custom_call.1} parent=51 // pred_fallthru
          _
      $region52: #{tpu_custom_call.1} parent=5 // pred_fallthru
        _
    $region6: #{tpu_custom_call.1} parent=1 // loop_footer
      %s23 = sadd.s32 1, %s19
    $region7: #{tpu_custom_call.1} parent=1 // loop_footer_branch
      %18 = sbr.rel target = $region3
    $region8: #{tpu_custom_call.1} parent=1 // loop_exit
      _
    %656 = vsyncpa [#allocation3], 1
    %s657 = scalar_lea.sflag [#allocation3], 1
    %658 = vsyncpa %s657, 1
    %659 = vsyncpa [#allocation5], 1
    %s660 = scalar_lea.sflag [#allocation5], 1
    %661 = vsyncpa %s660, 1

</llo_original>
